<compile_context>
chip_gen: v7x
topology: tpu7x:2x2x1
jax: 0.10.0
libtpu: 0.0.40
codegen_flags: <defaults>
</compile_context>

<pallas_src>
import functools

import jax
import jax.numpy as jnp
from jax.experimental import pallas as pl
from jax.experimental.pallas import tpu as pltpu


# ---------------------------------------------------------------------------
# Helpers
# ---------------------------------------------------------------------------
def generate_perfect_shuffle(k, n):
    return [i % k * (n // k) + i // k for i in range(n)]


def _round_up(x, m):
    return (x + m - 1) // m * m


def block_diag_3d(blocks):
    """(k, r, c) stack of blocks -> (k*r, k*c) block-diagonal matrix (reference only)."""
    k, r, c = blocks.shape
    out = jnp.zeros((k, r, k, c), blocks.dtype)
    idx = jnp.arange(k)
    out = out.at[idx, :, idx, :].set(blocks)
    return out.reshape(k * r, k * c)


# ---------------------------------------------------------------------------
# Fused Pallas kernel: build the looked-up Monarch rows directly
# ---------------------------------------------------------------------------
def _monarch_rows_kernel(lrows_ref, onehot_ref, e_ref, m_ref, r_ref, o_ref,
                         *, kr, br2):
    """One token tile; produces the full (tt, emb) output rows.

    lrows_ref  : (tt, bl2)       L[b_t, l_t, :] rows for this token tile
    onehot_ref : (tt, kl)        one-hot of the per-token L-block id b_t
    e_ref      : (kr, bl2, br1)  const: E[rk, s, j] = [(rk*br1+j)//kl == s]
    m_ref      : (kr, kl,  br1)  const: M[rk, c, j] = [(rk*br1+j)%kl  == c]
    r_ref      : (kr, br1, br2)  R blocks, VMEM-resident across the whole grid
    o_ref      : (tt, emb)       output rows (full emb width -> lane-dense)
    """
    lrows = lrows_ref[...]                       # (tt, bl2)
    onehot = onehot_ref[...]                     # (tt, kl)
    cdt = lrows.dtype
    for rk in range(kr):                         # static unroll; kr is small
        # Perfect shuffle + BD(L) layout folded into constant selection matmuls
        # (exact 0/1 selection -> accumulate in the compute dtype).
        gathered = jnp.dot(lrows, e_ref[rk], preferred_element_type=cdt)   # (tt, br1)
        maskv = jnp.dot(onehot, m_ref[rk], preferred_element_type=cdt)     # (tt, br1)
        u = (gathered * maskv).astype(r_ref.dtype)                         # Lp rows, rk slice
        res = jnp.dot(u, r_ref[rk], preferred_element_type=jnp.float32)    # (tt, br2)
        o_ref[:, rk * br2:(rk + 1) * br2] = res.astype(o_ref.dtype)


def monarch_embedding_lookup(L, R, ids, *, token_tile=1024, compute_dtype=None,
                             vmem_budget_bytes=40 << 20):
    """out = (BD(L)[:, p] @ BD(R))[ids]  without materializing the full table."""
    kl, bl1, bl2 = L.shape
    kr, br1, br2 = R.shape
    assert kl * bl2 == kr * br1, "Monarch middle dimensions must chain"
    vocab, emb = kl * bl1, kr * br2
    out_dtype = L.dtype
    cdt = compute_dtype if compute_dtype is not None else L.dtype

    orig_shape = ids.shape
    flat = ids.reshape(-1).astype(jnp.int32)
    T = flat.shape[0]

    # ---- tile sizing under an explicit VMEM budget ------------------------
    in_it = jnp.dtype(cdt).itemsize
    out_it = jnp.dtype(out_dtype).itemsize
    # resident constants (E, M, R), counted double-buffered to be safe
    resident = 2 * in_it * (kr * bl2 * br1 + kr * kl * br1 + kr * br1 * br2)
    # per-token double-buffered streaming bytes (lrows, onehot in; out rows out)
    per_token = 2 * (bl2 * in_it + kl * in_it + emb * out_it)
    avail = max(vmem_budget_bytes - resident, per_token * 8)
    tt_cap = max(8, (avail // per_token) // 8 * 8)
    tt = min(_round_up(token_tile, 8), tt_cap, _round_up(T, 8))
    if T >= 16:  # keep >= 2 grid blocks so both v7x TensorCores get work
        tt = min(tt, _round_up(pl.cdiv(T, 2), 8))
    Tpad = _round_up(T, tt)
    flat = jnp.pad(flat, (0, Tpad - T))          # pad with token 0; sliced off

    # ---- tiny token-count-sized prep (pure JAX; bl2/kl wide, not emb wide) --
    lrows = L.reshape(vocab, bl2)[flat].astype(cdt)                          # (Tpad, bl2)
    onehot = ((flat // bl1)[:, None] == jnp.arange(kl)[None, :]).astype(cdt)  # (Tpad, kl)

    # ---- compile-time constant selection operators (KB-scale) --------------
    mcols = jnp.arange(kr * br1, dtype=jnp.int32).reshape(kr, br1)
    E_all = (mcols[:, None, :] // kl ==
             jnp.arange(bl2, dtype=jnp.int32)[None, :, None]).astype(cdt)   # (kr, bl2, br1)
    M_all = (mcols[:, None, :] % kl ==
             jnp.arange(kl, dtype=jnp.int32)[None, :, None]).astype(cdt)    # (kr, kl, br1)
    Rc = R.astype(cdt)

    vmem_needed = resident + per_token * tt + (2 << 20)
    vmem_limit = int(min(max(vmem_needed, 16 << 20), 56 << 20))  # stay under v7x's 64 MiB

    grid = (Tpad // tt,)
    kernel = functools.partial(_monarch_rows_kernel, kr=kr, br2=br2)

    out = pl.pallas_call(
        kernel,
        out_shape=jax.ShapeDtypeStruct((Tpad, emb), out_dtype),
        grid=grid,
        in_specs=[
            pl.BlockSpec((tt, bl2), lambda i: (i, 0)),           # per-tile L rows
            pl.BlockSpec((tt, kl), lambda i: (i, 0)),            # per-tile one-hot ids
            pl.BlockSpec((kr, bl2, br1), lambda i: (0, 0, 0)),   # E: resident constant
            pl.BlockSpec((kr, kl, br1), lambda i: (0, 0, 0)),    # M: resident constant
            pl.BlockSpec((kr, br1, br2), lambda i: (0, 0, 0)),   # R: resident, DMA'd once
        ],
        out_specs=pl.BlockSpec((tt, emb), lambda i: (i, 0)),     # full-width, lane-dense
        compiler_params=pltpu.CompilerParams(
            dimension_semantics=("parallel",),
            vmem_limit_bytes=vmem_limit),
    )(lrows, onehot, E_all, M_all, Rc)

    if Tpad != T:
        out = out[:T]
    return out.reshape(orig_shape + (emb,))


# ---------------------------------------------------------------------------
# MonarchEmbedding (JAX/Pallas)
# ---------------------------------------------------------------------------
class MonarchEmbeddingPallas:
    def __init__(self, kl, bl1, bl2, kr, br1, br2, key, use_pl=False, use_pr=False,
                 dtype=jnp.float32, compute_dtype=None, token_tile=1024):
        assert kl * bl2 == kr * br1, "Monarch middle dimensions must chain"
        self.kl, self.bl1, self.bl2 = kl, bl1, bl2
        self.kr, self.br1, self.br2 = kr, br1, br2
        kL, kR = jax.random.split(key)
        # nn.init.normal_(std=0.001)
        self.L = (0.001 * jax.random.normal(kL, (kl, bl1, bl2))).astype(dtype)
        self.R = (0.001 * jax.random.normal(kR, (kr, br1, br2))).astype(dtype)
        self.p = jnp.asarray(generate_perfect_shuffle(kl, bl2 * kl), dtype=jnp.int32)
        self.use_pl = use_pl
        self.use_pr = use_pr
        self.compute_dtype = compute_dtype   # set jnp.bfloat16 on v6e/v7x (loosen tols)
        self.token_tile = token_tile
        # TODO(synk): use_pl / use_pr permutation branches unused (defaults False).

    @property
    def weight(self):
        # Debug/reference-only full table (pure JAX); forward never builds it.
        Lf = block_diag_3d(self.L)
        Rf = block_diag_3d(self.R)
        return jnp.take(Lf, self.p, axis=1) @ Rf

    def __call__(self, x):
        return monarch_embedding_lookup(self.L, self.R, x,
                                        token_tile=self.token_tile,
                                        compute_dtype=self.compute_dtype)

    # pure-JAX reference for validation
    def reference(self, x):
        return self.weight[x]


def _check(layer, x, name):
    out = jax.block_until_ready(layer(x))
    ref = jax.block_until_ready(layer.reference(x))
    assert out.shape == ref.shape, (name, out.shape, ref.shape)
    scale = float(jnp.max(jnp.abs(ref))) + 1e-30
    err = float(jnp.max(jnp.abs(out.astype(jnp.float32) - ref.astype(jnp.float32)))) / scale
    assert err < 2e-2, f"{name}: mismatch vs reference (rel err {err:.3e})"
    return out


# ---------------------------------------------------------------------------
if __name__ == "__main__":
    key = jax.random.PRNGKey(0)
    k_param, k_param2, k_ids, k_ids2 = jax.random.split(key, 4)

    # Config 1: vocab = 32, mid = 64, emb = 256 (br2 % 128 == 0), ids (2, 8).
    kl, bl1, bl2 = 4, 8, 16
    kr, br1, br2 = 2, 32, 128
    layer = MonarchEmbeddingPallas(kl, bl1, bl2, kr, br1, br2, key=k_param)
    x = jax.random.randint(k_ids, (2, 8), 0, kl * bl1, dtype=jnp.int32)
    out = _check(layer, x, "cfg1")
    assert out.shape == (2, 8, kr * br2), out.shape

    # Config 2: non-128-aligned emb (br2 = 48, emb = 96) exercises the
    # full-width lane-dense output path without any transpose fallback.
    kl2, bl1_2, bl2_2 = 4, 8, 16
    kr2, br1_2, br2_2 = 2, 32, 48
    layer2 = MonarchEmbeddingPallas(kl2, bl1_2, bl2_2, kr2, br1_2, br2_2, key=k_param2)
    x2 = jax.random.randint(k_ids2, (3, 5), 0, kl2 * bl1_2, dtype=jnp.int32)
    out2 = _check(layer2, x2, "cfg2")
    assert out2.shape == (3, 5, kr2 * br2_2), out2.shape

    print("KERNEL_OK")
</pallas_src>

<mosaic_0001>
module attributes {stable_mosaic.version = 11 : i64} {
  func.func @_monarch_rows_kernel(%arg0: i32, %arg1: memref<8x16xf32, #tpu.memory_space<vmem>>, %arg2: memref<8x4xf32, #tpu.memory_space<vmem>>, %arg3: memref<2x16x32xf32, #tpu.memory_space<vmem>>, %arg4: memref<2x4x32xf32, #tpu.memory_space<vmem>>, %arg5: memref<2x32x128xf32, #tpu.memory_space<vmem>>, %arg6: memref<8x256xf32, #tpu.memory_space<vmem>>) attributes {dimension_semantics = [#tpu.dimension_semantics<parallel>], iteration_bounds = array<i64: 2>, scalar_prefetch = 0 : i64, scratch_operands = 0 : i64, tpu.core_type = #tpu.core_type<tc>, window_params = [{transform_indices = @transform_0, window_bounds = array<i64: 8, 16>}, {transform_indices = @transform_1, window_bounds = array<i64: 8, 4>}, {pipeline_mode = #tpu.pipeline_mode<synchronous>, transform_indices = @transform_2, window_bounds = array<i64: 2, 16, 32>}, {pipeline_mode = #tpu.pipeline_mode<synchronous>, transform_indices = @transform_3, window_bounds = array<i64: 2, 4, 32>}, {pipeline_mode = #tpu.pipeline_mode<synchronous>, transform_indices = @transform_4, window_bounds = array<i64: 2, 32, 128>}, {transform_indices = @transform_5, window_bounds = array<i64: 8, 256>}]} {
    %c0 = arith.constant 0 : index
    %c0_0 = arith.constant 0 : index
    %0 = vector.load %arg1[%c0, %c0_0] : memref<8x16xf32, #tpu.memory_space<vmem>>, vector<8x16xf32>
    %c0_1 = arith.constant 0 : index
    %c0_2 = arith.constant 0 : index
    %1 = vector.load %arg2[%c0_1, %c0_2] : memref<8x4xf32, #tpu.memory_space<vmem>>, vector<8x4xf32>
    %c0_3 = arith.constant 0 : index
    %c0_4 = arith.constant 0 : index
    %c0_5 = arith.constant 0 : index
    %2 = vector.load %arg3[%c0_3, %c0_4, %c0_5] : memref<2x16x32xf32, #tpu.memory_space<vmem>>, vector<1x16x32xf32>
    %3 = vector.shape_cast %2 : vector<1x16x32xf32> to vector<16x32xf32>
    %cst = arith.constant dense<0.000000e+00> : vector<8x32xf32>
    %4 = tpu.matmul %0, %3, %cst {dimension_numbers = #tpu.dot_dimension_numbers<[1], [0], [0], [1], [0, 0, 1, 1], [], []>} : vector<8x16xf32>, vector<16x32xf32>, vector<8x32xf32> -> vector<8x32xf32>
    %c0_6 = arith.constant 0 : index
    %c0_7 = arith.constant 0 : index
    %c0_8 = arith.constant 0 : index
    %5 = vector.load %arg4[%c0_6, %c0_7, %c0_8] : memref<2x4x32xf32, #tpu.memory_space<vmem>>, vector<1x4x32xf32>
    %6 = vector.shape_cast %5 : vector<1x4x32xf32> to vector<4x32xf32>
    %cst_9 = arith.constant dense<0.000000e+00> : vector<8x32xf32>
    %7 = tpu.matmul %1, %6, %cst_9 {dimension_numbers = #tpu.dot_dimension_numbers<[1], [0], [0], [1], [0, 0, 1, 1], [], []>} : vector<8x4xf32>, vector<4x32xf32>, vector<8x32xf32> -> vector<8x32xf32>
    %8 = arith.mulf %4, %7 : vector<8x32xf32>
    %c0_10 = arith.constant 0 : index
    %c0_11 = arith.constant 0 : index
    %c0_12 = arith.constant 0 : index
    %9 = vector.load %arg5[%c0_10, %c0_11, %c0_12] : memref<2x32x128xf32, #tpu.memory_space<vmem>>, vector<1x32x128xf32>
    %10 = vector.shape_cast %9 : vector<1x32x128xf32> to vector<32x128xf32>
    %cst_13 = arith.constant dense<0.000000e+00> : vector<8x128xf32>
    %11 = tpu.matmul %8, %10, %cst_13 {dimension_numbers = #tpu.dot_dimension_numbers<[1], [0], [0], [1], [0, 0, 1, 1], [], []>} : vector<8x32xf32>, vector<32x128xf32>, vector<8x128xf32> -> vector<8x128xf32>
    %c0_14 = arith.constant 0 : index
    %c0_15 = arith.constant 0 : index
    %12 = vector.load %arg6[%c0_14, %c0_15] : memref<8x256xf32, #tpu.memory_space<vmem>>, vector<8x128xf32>
    tpu.vector_store %arg6[%c0_14, %c0_15], %11 {strides = array<i32>} : memref<8x256xf32, #tpu.memory_space<vmem>>, vector<8x128xf32>,
    %c1 = arith.constant 1 : index
    %c0_16 = arith.constant 0 : index
    %c0_17 = arith.constant 0 : index
    %13 = vector.load %arg3[%c1, %c0_16, %c0_17] : memref<2x16x32xf32, #tpu.memory_space<vmem>>, vector<1x16x32xf32>
    %14 = vector.shape_cast %13 : vector<1x16x32xf32> to vector<16x32xf32>
    %cst_18 = arith.constant dense<0.000000e+00> : vector<8x32xf32>
    %15 = tpu.matmul %0, %14, %cst_18 {dimension_numbers = #tpu.dot_dimension_numbers<[1], [0], [0], [1], [0, 0, 1, 1], [], []>} : vector<8x16xf32>, vector<16x32xf32>, vector<8x32xf32> -> vector<8x32xf32>
    %c1_19 = arith.constant 1 : index
    %c0_20 = arith.constant 0 : index
    %c0_21 = arith.constant 0 : index
    %16 = vector.load %arg4[%c1_19, %c0_20, %c0_21] : memref<2x4x32xf32, #tpu.memory_space<vmem>>, vector<1x4x32xf32>
    %17 = vector.shape_cast %16 : vector<1x4x32xf32> to vector<4x32xf32>
    %cst_22 = arith.constant dense<0.000000e+00> : vector<8x32xf32>
    %18 = tpu.matmul %1, %17, %cst_22 {dimension_numbers = #tpu.dot_dimension_numbers<[1], [0], [0], [1], [0, 0, 1, 1], [], []>} : vector<8x4xf32>, vector<4x32xf32>, vector<8x32xf32> -> vector<8x32xf32>
    %19 = arith.mulf %15, %18 : vector<8x32xf32>
    %c1_23 = arith.constant 1 : index
    %c0_24 = arith.constant 0 : index
    %c0_25 = arith.constant 0 : index
    %20 = vector.load %arg5[%c1_23, %c0_24, %c0_25] : memref<2x32x128xf32, #tpu.memory_space<vmem>>, vector<1x32x128xf32>
    %21 = vector.shape_cast %20 : vector<1x32x128xf32> to vector<32x128xf32>
    %cst_26 = arith.constant dense<0.000000e+00> : vector<8x128xf32>
    %22 = tpu.matmul %19, %21, %cst_26 {dimension_numbers = #tpu.dot_dimension_numbers<[1], [0], [0], [1], [0, 0, 1, 1], [], []>} : vector<8x32xf32>, vector<32x128xf32>, vector<8x128xf32> -> vector<8x128xf32>
    %c0_27 = arith.constant 0 : index
    %c128 = arith.constant 128 : index
    %23 = vector.load %arg6[%c0_27, %c128] : memref<8x256xf32, #tpu.memory_space<vmem>>, vector<8x128xf32>
    tpu.vector_store %arg6[%c0_27, %c128], %22 {strides = array<i32>} : memref<8x256xf32, #tpu.memory_space<vmem>>, vector<8x128xf32>,
    return
  }
  func.func @transform_0(%arg0: i32) -> (i32, i32) {
    %c0_i32 = arith.constant 0 : i32
    %c0_i32_0 = arith.constant 0 : i32
    return %arg0, %c0_i32 : i32, i32
  }
  func.func @transform_1(%arg0: i32) -> (i32, i32) {
    %c0_i32 = arith.constant 0 : i32
    %c0_i32_0 = arith.constant 0 : i32
    return %arg0, %c0_i32 : i32, i32
  }
  func.func @transform_2(%arg0: i32) -> (i32, i32, i32) {
    %c0_i32 = arith.constant 0 : i32
    %c0_i32_0 = arith.constant 0 : i32
    %c0_i32_1 = arith.constant 0 : i32
    %c0_i32_2 = arith.constant 0 : i32
    return %c0_i32, %c0_i32_0, %c0_i32_1 : i32, i32, i32
  }
  func.func @transform_3(%arg0: i32) -> (i32, i32, i32) {
    %c0_i32 = arith.constant 0 : i32
    %c0_i32_0 = arith.constant 0 : i32
    %c0_i32_1 = arith.constant 0 : i32
    %c0_i32_2 = arith.constant 0 : i32
    return %c0_i32, %c0_i32_0, %c0_i32_1 : i32, i32, i32
  }
  func.func @transform_4(%arg0: i32) -> (i32, i32, i32) {
    %c0_i32 = arith.constant 0 : i32
    %c0_i32_0 = arith.constant 0 : i32
    %c0_i32_1 = arith.constant 0 : i32
    %c0_i32_2 = arith.constant 0 : i32
    return %c0_i32, %c0_i32_0, %c0_i32_1 : i32, i32, i32
  }
  func.func @transform_5(%arg0: i32) -> (i32, i32) {
    %c0_i32 = arith.constant 0 : i32
    %c0_i32_0 = arith.constant 0 : i32
    return %arg0, %c0_i32 : i32, i32
  }
}

</mosaic_0001>

<llo_original>
// kernel: tpu_custom_call.1
$region0: #{tpu_custom_call.1}
  #allocation0 [shape = 'u32[]', space=smem, size = 0x4, offset = 0x4, fixed_abs, tag = 'smem constant byte address 0x4 - core index']
  #allocation1 [shape = 'u32[144,128]{1,0:T(1,128)}', space=vmem, size = 0x12000, scoped, tag = 'internal scratch']
  %s0 = inlined_call_operand.vmem [shape: f32[16,16], index: 0, kind: input, shape index: {}]
  %s1 = inlined_call_operand.vmem [shape: f32[16,4], index: 1, kind: input, shape index: {}]
  %s2 = inlined_call_operand.hbm [shape: f32[2,16,32], index: 2, kind: input, shape index: {}]
  %s3 = inlined_call_operand.vmem [shape: f32[2,4,32], index: 3, kind: input, shape index: {}]
  %s4 = inlined_call_operand.hbm [shape: f32[2,32,128], index: 4, kind: input, shape index: {}]
  %s5 = inlined_call_operand.hbm [shape: f32[16,256], index: 5, kind: output, shape index: {}]
  %s6 = sld [smem:[#allocation0]]
  $region61: #{tpu_custom_call.1} parent=0
    _
  %s8 = ssub.s32 1, %s6
  %s9 = scalar_select 0, %s8, %s6
  $region1: #{tpu_custom_call.1} parent=0
    #allocation2 [shape = 'u8[16384]{0}', space=vmem, size = 0x4000, scoped, tag = 'input window, operand 2, single buffered']
    #allocation3 [shape = 's32[2]{0}', space=sflag, size = 0x8, scoped, tag = 'scoped memory for tpu_custom_call.1']
    #allocation4 [shape = 's32[2]{0}', space=sflag, size = 0x8, scoped, tag = 'scoped memory for tpu_custom_call.1']
    #allocation5 [shape = 'u8[32768]{0}', space=vmem, size = 0x8000, scoped, tag = 'input window, operand 4, single buffered']
    #allocation6 [shape = 's32[1]{0}', space=sflag, size = 0x4, scoped, tag = 'scoped memory for tpu_custom_call.1']
    #allocation7 [shape = 'u8[16384]{0}', space=vmem, size = 0x4000, scoped, tag = 'output window, operand 0']
    %10 = vsyncpa [#allocation3], 0
    %11 = vsyncpa [#allocation6], 0
    %12 = vsyncpa [#allocation4], 0
    %s13 = scalar_lea.sflag [#allocation4], 1
    %14 = vsyncpa %s13, 0
    loop: start=0, step=1, limit=4
    $region2: #{tpu_custom_call.1} parent=1 // loop_pre_header
      _
    $region3: #{tpu_custom_call.1} parent=1 // loop_header
      %s16 = sphi 0, %s20
      %p17 = scmp.ge.s32.totalorder %s16, 4
      %s26 = sphi 0, %s28
      %s29 = sphi 0, %s26
      %s30 = sphi 0, %s29
      %s46 = sphi 0, %s30
      %s52 = sphi 0, %s54
      %s55 = sphi 0, %s52
      %s56 = sphi 0, %s55
      %s72 = sphi 0, %s56
      %s76 = sphi 0, %s76
      %s78 = sphi 0, %s76
      %s79 = sphi 0, %s78
      %s93 = sphi 0, %s79
      %s97 = sphi 0, %s97
      %s99 = sphi 0, %s97
      %s100 = sphi 0, %s99
      %s114 = sphi 0, %s100
      %s118 = sphi 0, %s118
      %s120 = sphi 0, %s118
      %s121 = sphi 0, %s120
      %s135 = sphi 0, %s121
      %s141 = sphi 0, %s143
      %s144 = sphi 0, %s141
      %s145 = sphi 0, %s144
      %s161 = sphi 0, %s145
    $region4: #{tpu_custom_call.1} parent=1 // loop_header_branch
      %19 = sbr.rel (%p17) target = $region8
    $region5: #{tpu_custom_call.1} parent=1 // loop_body
      %s21 = ssub.s32 %s16, 1
      %s22 = ssub.s32 %s16, 2
      %s23 = sadd.s32 %s16, 1
      %s24 = ssub.s32 %s16, %s23
      %p25 = scmp.eq.s32.totalorder %s24, 0
      %s27 = sadd.s32 %s26, 1
      %s28 = scalar_select %p25, %s26, %s27
      %p31 = pneg %p25
      %p32 = scmp.eq.s32.totalorder %s16, 1
      %p33 = por %p31, %p32
      %p34 = scmp.ne.s32.totalorder %s26, %s29
      %p35 = scmp.eq.s32.totalorder %s16, 0
      %p36 = por %p34, %p35
      %p37 = scmp.ne.s32.totalorder %s26, %s29
      %p38 = scmp.eq.s32.totalorder %s21, 1
      %p39 = por %p37, %p38
      %p40 = scmp.ne.s32.totalorder %s29, %s30
      %p41 = scmp.eq.s32.totalorder %s21, 0
      %p42 = por %p40, %p41
      %p43 = scmp.ne.s32.totalorder %s29, %s30
      %p44 = scmp.eq.s32.totalorder %s22, 1
      %p45 = por %p43, %p44
      %p47 = scmp.ne.s32.totalorder %s30, %s46
      %p48 = scmp.eq.s32.totalorder %s22, 0
      %p49 = por %p47, %p48
      %s50 = ssub.s32 %s16, %s23
      %p51 = scmp.eq.s32.totalorder %s50, 0
      %s53 = sadd.s32 %s52, 1
      %s54 = scalar_select %p51, %s52, %s53
      %p57 = pneg %p51
      %p58 = scmp.eq.s32.totalorder %s16, 1
      %p59 = por %p57, %p58
      %p60 = scmp.ne.s32.totalorder %s52, %s55
      %p61 = scmp.eq.s32.totalorder %s16, 0
      %p62 = por %p60, %p61
      %p63 = scmp.ne.s32.totalorder %s52, %s55
      %p64 = scmp.eq.s32.totalorder %s21, 1
      %p65 = por %p63, %p64
      %p66 = scmp.ne.s32.totalorder %s55, %s56
      %p67 = scmp.eq.s32.totalorder %s21, 0
      %p68 = por %p66, %p67
      %p69 = scmp.ne.s32.totalorder %s55, %s56
      %p70 = scmp.eq.s32.totalorder %s22, 1
      %p71 = por %p69, %p70
      %p73 = scmp.ne.s32.totalorder %s56, %s72
      %p74 = scmp.eq.s32.totalorder %s22, 0
      %p75 = por %p73, %p74
      %s77 = sadd.s32 %s76, 1
      %p80 = scmp.eq.s32.totalorder %s16, 1
      %p81 = scmp.ne.s32.totalorder %s76, %s78
      %p82 = scmp.eq.s32.totalorder %s16, 0
      %p83 = por %p81, %p82
      %p84 = scmp.ne.s32.totalorder %s76, %s78
      %p85 = scmp.eq.s32.totalorder %s21, 1
      %p86 = por %p84, %p85
      %p87 = scmp.ne.s32.totalorder %s78, %s79
      %p88 = scmp.eq.s32.totalorder %s21, 0
      %p89 = por %p87, %p88
      %p90 = scmp.ne.s32.totalorder %s78, %s79
      %p91 = scmp.eq.s32.totalorder %s22, 1
      %p92 = por %p90, %p91
      %p94 = scmp.ne.s32.totalorder %s79, %s93
      %p95 = scmp.eq.s32.totalorder %s22, 0
      %p96 = por %p94, %p95
      %s98 = sadd.s32 %s97, 1
      %p101 = scmp.eq.s32.totalorder %s16, 1
      %p102 = scmp.ne.s32.totalorder %s97, %s99
      %p103 = scmp.eq.s32.totalorder %s16, 0
      %p104 = por %p102, %p103
      %p105 = scmp.ne.s32.totalorder %s97, %s99
      %p106 = scmp.eq.s32.totalorder %s21, 1
      %p107 = por %p105, %p106
      %p108 = scmp.ne.s32.totalorder %s99, %s100
      %p109 = scmp.eq.s32.totalorder %s21, 0
      %p110 = por %p108, %p109
      %p111 = scmp.ne.s32.totalorder %s99, %s100
      %p112 = scmp.eq.s32.totalorder %s22, 1
      %p113 = por %p111, %p112
      %p115 = scmp.ne.s32.totalorder %s100, %s114
      %p116 = scmp.eq.s32.totalorder %s22, 0
      %p117 = por %p115, %p116
      %s119 = sadd.s32 %s118, 1
      %p122 = scmp.eq.s32.totalorder %s16, 1
      %p123 = scmp.ne.s32.totalorder %s118, %s120
      %p124 = scmp.eq.s32.totalorder %s16, 0
      %p125 = por %p123, %p124
      %p126 = scmp.ne.s32.totalorder %s118, %s120
      %p127 = scmp.eq.s32.totalorder %s21, 1
      %p128 = por %p126, %p127
      %p129 = scmp.ne.s32.totalorder %s120, %s121
      %p130 = scmp.eq.s32.totalorder %s21, 0
      %p131 = por %p129, %p130
      %p132 = scmp.ne.s32.totalorder %s120, %s121
      %p133 = scmp.eq.s32.totalorder %s22, 1
      %p134 = por %p132, %p133
      %p136 = scmp.ne.s32.totalorder %s121, %s135
      %p137 = scmp.eq.s32.totalorder %s22, 0
      %p138 = por %p136, %p137
      %s139 = ssub.s32 %s16, %s23
      %p140 = scmp.eq.s32.totalorder %s139, 0
      %s142 = sadd.s32 %s141, 1
      %s143 = scalar_select %p140, %s141, %s142
      %p146 = pneg %p140
      %p147 = scmp.eq.s32.totalorder %s16, 1
      %p148 = por %p146, %p147
      %p149 = scmp.ne.s32.totalorder %s141, %s144
      %p150 = scmp.eq.s32.totalorder %s16, 0
      %p151 = por %p149, %p150
      %p152 = scmp.ne.s32.totalorder %s141, %s144
      %p153 = scmp.eq.s32.totalorder %s21, 1
      %p154 = por %p152, %p153
      %p155 = scmp.ne.s32.totalorder %s144, %s145
      %p156 = scmp.eq.s32.totalorder %s21, 0
      %p157 = por %p155, %p156
      %p158 = scmp.ne.s32.totalorder %s144, %s145
      %p159 = scmp.eq.s32.totalorder %s22, 1
      %p160 = por %p158, %p159
      %p162 = scmp.ne.s32.totalorder %s145, %s161
      %p163 = scmp.eq.s32.totalorder %s22, 0
      %p164 = por %p162, %p163
      %p165 = scmp.le.s32.totalorder 1, %s16
      %p166 = scmp.lt.s32.totalorder %s16, 3
      %p167 = pnand %p165, %p166
      %p168 = pneg %p167
      // Predicated region
      $region9: #{tpu_custom_call.1} parent=5 // pred_check
        _
      $region10: #{tpu_custom_call.1} parent=5 // pred_check_branch
        %170 = sbr.rel (%p167) target = $region12
      $region11: #{tpu_custom_call.1} parent=5 // pred_region
        %s171 = ssub.s32 %s16, 1
        // Predicated region
        $region13: #{tpu_custom_call.1} parent=11 // pred_check
          %p172 = pneg %p89
        $region14: #{tpu_custom_call.1} parent=11 // pred_check_branch
          %174 = sbr.rel (%p172) target = $region16
        $region15: #{tpu_custom_call.1} parent=11 // pred_region
          %s176 = ssub.s32 512, 512
          %177 = vsyncadd [#allocation3], %s176
          %s178 = sshll.u32 [#allocation2], 4
          %s179 = int_to_ptr.vmem [resolvable:$true] %s178
          %184 = dma.hbm_to_vmem [thread:$0]  %s2, 512, %s179, [#allocation3], 128, 128, 8
        $region16: #{tpu_custom_call.1} parent=11 // pred_fallthru
          _
        // Predicated region
        $region17: #{tpu_custom_call.1} parent=11 // pred_check
          %p185 = pneg %p110
        $region18: #{tpu_custom_call.1} parent=11 // pred_check_branch
          %187 = sbr.rel (%p185) target = $region20
        $region19: #{tpu_custom_call.1} parent=11 // pred_region
          _
        $region20: #{tpu_custom_call.1} parent=11 // pred_fallthru
          _
        // Predicated region
        $region21: #{tpu_custom_call.1} parent=11 // pred_check
          %p188 = pneg %p131
        $region22: #{tpu_custom_call.1} parent=11 // pred_check_branch
          %190 = sbr.rel (%p188) target = $region24
        $region23: #{tpu_custom_call.1} parent=11 // pred_region
          %s192 = ssub.s32 1024, 1024
          %193 = vsyncadd [#allocation6], %s192
          %s194 = sshll.u32 [#allocation5], 4
          %s195 = int_to_ptr.vmem [resolvable:$true] %s194
          %200 = dma.hbm_to_vmem [thread:$0]  %s4, 1024, %s195, [#allocation6], 128, 128, 8
        $region24: #{tpu_custom_call.1} parent=11 // pred_fallthru
          _
      $region12: #{tpu_custom_call.1} parent=5 // pred_fallthru
        _
      %p201 = scmp.lt.s32.totalorder %s16, 2
      // Predicated region
      $region25: #{tpu_custom_call.1} parent=5 // pred_check
        %p202 = pneg %p201
      $region26: #{tpu_custom_call.1} parent=5 // pred_check_branch
        %204 = sbr.rel (%p202) target = $region28
      $region27: #{tpu_custom_call.1} parent=5 // pred_region
        // Predicated region
        $region29: #{tpu_custom_call.1} parent=27 // pred_check
          %p205 = pneg %p36
        $region30: #{tpu_custom_call.1} parent=27 // pred_check_branch
          %207 = sbr.rel (%p205) target = $region32
        $region31: #{tpu_custom_call.1} parent=27 // pred_region
          %p208 = scmp.lt.s32.totalorder %s16, 1
          %s209 = scalar_select %p208, %s16, 1
          %s210 = smul.addr %s209, 8
          %s211 = scalar_lea.vmem %s0, %s210
        $region32: #{tpu_custom_call.1} parent=27 // pred_fallthru
          _
        // Predicated region
        $region33: #{tpu_custom_call.1} parent=27 // pred_check
          %p212 = pneg %p62
        $region34: #{tpu_custom_call.1} parent=27 // pred_check_branch
          %214 = sbr.rel (%p212) target = $region36
        $region35: #{tpu_custom_call.1} parent=27 // pred_region
          %p215 = scmp.lt.s32.totalorder %s16, 1
          %s216 = scalar_select %p215, %s16, 1
          %s217 = smul.addr %s216, 8
          %s218 = scalar_lea.vmem %s1, %s217
        $region36: #{tpu_custom_call.1} parent=27 // pred_fallthru
          _
      $region28: #{tpu_custom_call.1} parent=5 // pred_fallthru
        _
      %p219 = scmp.le.s32.totalorder 1, %s16
      %p220 = scmp.lt.s32.totalorder %s16, 3
      %p221 = pnand %p219, %p220
      %p222 = pneg %p221
      // Predicated region
      $region37: #{tpu_custom_call.1} parent=5 // pred_check
        _
      $region38: #{tpu_custom_call.1} parent=5 // pred_check_branch
        %224 = sbr.rel (%p221) target = $region40
      $region39: #{tpu_custom_call.1} parent=5 // pred_region
        %s225 = ssub.s32 %s16, 1
        // Predicated region
        $region41: #{tpu_custom_call.1} parent=39 // pred_check
          %p226 = pneg %p89
        $region42: #{tpu_custom_call.1} parent=39 // pred_check_branch
          %228 = sbr.rel (%p226) target = $region44
        $region43: #{tpu_custom_call.1} parent=39 // pred_region
          %229 = dma.done [#allocation3], 512
        $region44: #{tpu_custom_call.1} parent=39 // pred_fallthru
          _
        // Predicated region
        $region45: #{tpu_custom_call.1} parent=39 // pred_check
          %p230 = pneg %p131
        $region46: #{tpu_custom_call.1} parent=39 // pred_check_branch
          %232 = sbr.rel (%p230) target = $region48
        $region47: #{tpu_custom_call.1} parent=39 // pred_region
          %233 = dma.done [#allocation6], 1024
        $region48: #{tpu_custom_call.1} parent=39 // pred_fallthru
          _
        %p234 = scmp.lt.s32.totalorder %s21, 1
        %s235 = scalar_select %p234, %s21, 1
        %s236 = smul.addr %s235, 8
        %s237 = scalar_lea.vmem %s0, %s236
        %p238 = pneg %p42
        %p239 = pneg %p39
        %p240 = scmp.lt.s32.totalorder %s21, 1
        %s241 = scalar_select %p240, %s21, 1
        %s242 = smul.addr %s241, 8
        %s243 = scalar_lea.vmem %s1, %s242
        %p244 = pneg %p68
        %p245 = pneg %p65
        %p246 = pneg %p89
        %p247 = pneg %p86
        %p248 = pneg %p110
        %p249 = pneg %p107
        %p250 = pneg %p131
        %p251 = pneg %p128
        %p252 = pneg %p157
        %p253 = pneg %p154
        %s254 = sand.u32 %s144, 1
        %s255 = scalar_lea.sflag [#allocation4], %s254
        %s256 = sand.u32 %s144, 1
        %s257 = smul.addr %s256, 16
        %s258 = scalar_lea.vmem [#allocation7], %s257
        %p259 = scmp.lt.s32.totalorder %s21, 1
        %s260 = scalar_select %p259, %s21, 1
        %s261 = smul.addr %s260, 8
        %s262 = scalar_lea.vmem %s0, %s261
        %p263 = scmp.lt.s32.totalorder %s21, 1
        %s264 = scalar_select %p263, %s21, 1
        %s265 = smul.addr %s264, 8
        %s266 = scalar_lea.vmem %s1, %s265
        %v267 = vld [vmem:[%s262] sm:$0xff]
        %v268 = vld [vmem:[%s266] sm:$0xff]
        %v269 = vld [vmem:[#allocation2] sm:$0xff]
        %v270 = vld [vmem:[#allocation2 + $0x8] sm:$0xff]
        %vm271 = vcmask 130048
        %v273 = vsel %vm271, %v267, 0
        %275 = vmatprep.subr.mxu0 0.0
        %276 = vmatpush1.msra.mxu0 %v269
        %277 = vmatprep.subr.mxu0 0.0
        %278 = vmatpush1.msra.mxu0 %v270
        %279 = vmatprep.subr.mxu0 0.0
        %280 = vmatpush1.msra.mxu0 0.0
        %281 = vmatprep.subr.mxu0 0.0
        %282 = vmatpush1.msra.mxu0 0.0
        %283 = vmatprep.subr.mxu0 0.0
        %284 = vmatpush1.msra.mxu0 0.0
        %285 = vmatprep.subr.mxu0 0.0
        %286 = vmatpush1.msra.mxu0 0.0
        %287 = vmatprep.subr.mxu0 0.0
        %288 = vmatpush1.msra.mxu0 0.0
        %289 = vmatprep.subr.mxu0 0.0
        %290 = vmatpush1.msra.mxu0 0.0
        %291 = vmatprep.subr.mxu0 0.0
        %292 = vmatpush1.msra.mxu0 0.0
        %293 = vmatprep.subr.mxu0 0.0
        %294 = vmatpush1.msra.mxu0 0.0
        %295 = vmatprep.subr.mxu0 0.0
        %296 = vmatpush1.msra.mxu0 0.0
        %297 = vmatprep.subr.mxu0 0.0
        %298 = vmatpush1.msra.mxu0 0.0
        %299 = vmatprep.subr.mxu0 0.0
        %300 = vmatpush1.msra.mxu0 0.0
        %301 = vmatprep.subr.mxu0 0.0
        %302 = vmatpush1.msra.mxu0 0.0
        %303 = vmatprep.subr.mxu0 0.0
        %304 = vmatpush1.msra.mxu0 0.0
        %305 = vmatprep.subr.mxu0 0.0
        %306 = vmatpush1.msra.mxu0 0.0
        %307 = vmatprep.subr.mxu0 0.0
        %308 = vmatpush1.msra.mxu0 0.0
        %309 = vmatprep.subr.mxu0 0.0
        %310 = vmatpush1.msra.mxu0 0.0
        %311 = vmatprep.subr.mxu0 0.0
        %312 = vmatpush1.msra.mxu0 0.0
        %313 = vmatprep.subr.mxu0 0.0
        %314 = vmatpush1.msra.mxu0 0.0
        %315 = vmatprep.subr.mxu0 0.0
        %316 = vmatpush1.msra.mxu0 0.0
        %317 = vmatprep.subr.mxu0 0.0
        %318 = vmatpush1.msra.mxu0 0.0
        %319 = vmatprep.subr.mxu0 0.0
        %320 = vmatpush1.msra.mxu0 0.0
        %321 = vmatprep.subr.mxu0 0.0
        %322 = vmatpush1.msra.mxu0 0.0
        %323 = vmatprep.subr.mxu0 0.0
        %324 = vmatpush1.msra.mxu0 0.0
        %325 = vmatprep.subr.mxu0 0.0
        %326 = vmatpush1.msra.mxu0 0.0
        %327 = vmatprep.subr.mxu0 0.0
        %328 = vmatpush1.msra.mxu0 0.0
        %329 = vmatprep.subr.mxu0 0.0
        %330 = vmatpush1.msra.mxu0 0.0
        %331 = vmatprep.subr.mxu0 0.0
        %332 = vmatpush1.msra.mxu0 0.0
        %333 = vmatprep.subr.mxu0 0.0
        %334 = vmatpush1.msra.mxu0 0.0
        %335 = vmatprep.subr.mxu0 0.0
        %336 = vmatpush1.msra.mxu0 0.0
        %337 = vmatprep.subr.mxu0 0.0
        %338 = vmatpush1.msra.mxu0 0.0
        %339 = vmatprep.mubr.f32.mxu0 0.0
        %340 = vmatmul.mubr.f32.gmra.mrb[0].mxu0 %v273
        %v341 = vpop.f32.mrb[0].mxu0
        %v342 = vadd.f32 0.0, %v341
        %v343 = vpop.f32.mrb[0].mxu0
        %344 = vdwg.mxu0
        %v345 = vld [vmem:[%s3] sm:$0xf]
        %vm346 = vcmask 31744
        %v348 = vsel %vm346, %v268, 0
        %vm350 = vcmask 1043456
        %v352 = vsel %vm350, %v345, 0
        %354 = vmatprep.subr.mxu0 0.0
        %355 = vmatpush1.msra.mxu0 %v352
        %356 = vmatprep.subr.mxu0 0.0
        %357 = vmatpush1.msra.mxu0 0.0
        %358 = vmatprep.subr.mxu0 0.0
        %359 = vmatpush1.msra.mxu0 0.0
        %360 = vmatprep.subr.mxu0 0.0
        %361 = vmatpush1.msra.mxu0 0.0
        %362 = vmatprep.subr.mxu0 0.0
        %363 = vmatpush1.msra.mxu0 0.0
        %364 = vmatprep.subr.mxu0 0.0
        %365 = vmatpush1.msra.mxu0 0.0
        %366 = vmatprep.subr.mxu0 0.0
        %367 = vmatpush1.msra.mxu0 0.0
        %368 = vmatprep.subr.mxu0 0.0
        %369 = vmatpush1.msra.mxu0 0.0
        %370 = vmatprep.subr.mxu0 0.0
        %371 = vmatpush1.msra.mxu0 0.0
        %372 = vmatprep.subr.mxu0 0.0
        %373 = vmatpush1.msra.mxu0 0.0
        %374 = vmatprep.subr.mxu0 0.0
        %375 = vmatpush1.msra.mxu0 0.0
        %376 = vmatprep.subr.mxu0 0.0
        %377 = vmatpush1.msra.mxu0 0.0
        %378 = vmatprep.subr.mxu0 0.0
        %379 = vmatpush1.msra.mxu0 0.0
        %380 = vmatprep.subr.mxu0 0.0
        %381 = vmatpush1.msra.mxu0 0.0
        %382 = vmatprep.subr.mxu0 0.0
        %383 = vmatpush1.msra.mxu0 0.0
        %384 = vmatprep.subr.mxu0 0.0
        %385 = vmatpush1.msra.mxu0 0.0
        %386 = vmatprep.subr.mxu0 0.0
        %387 = vmatpush1.msra.mxu0 0.0
        %388 = vmatprep.subr.mxu0 0.0
        %389 = vmatpush1.msra.mxu0 0.0
        %390 = vmatprep.subr.mxu0 0.0
        %391 = vmatpush1.msra.mxu0 0.0
        %392 = vmatprep.subr.mxu0 0.0
        %393 = vmatpush1.msra.mxu0 0.0
        %394 = vmatprep.subr.mxu0 0.0
        %395 = vmatpush1.msra.mxu0 0.0
        %396 = vmatprep.subr.mxu0 0.0
        %397 = vmatpush1.msra.mxu0 0.0
        %398 = vmatprep.subr.mxu0 0.0
        %399 = vmatpush1.msra.mxu0 0.0
        %400 = vmatprep.subr.mxu0 0.0
        %401 = vmatpush1.msra.mxu0 0.0
        %402 = vmatprep.subr.mxu0 0.0
        %403 = vmatpush1.msra.mxu0 0.0
        %404 = vmatprep.subr.mxu0 0.0
        %405 = vmatpush1.msra.mxu0 0.0
        %406 = vmatprep.subr.mxu0 0.0
        %407 = vmatpush1.msra.mxu0 0.0
        %408 = vmatprep.subr.mxu0 0.0
        %409 = vmatpush1.msra.mxu0 0.0
        %410 = vmatprep.subr.mxu0 0.0
        %411 = vmatpush1.msra.mxu0 0.0
        %412 = vmatprep.subr.mxu0 0.0
        %413 = vmatpush1.msra.mxu0 0.0
        %414 = vmatprep.subr.mxu0 0.0
        %415 = vmatpush1.msra.mxu0 0.0
        %416 = vmatprep.subr.mxu0 0.0
        %417 = vmatpush1.msra.mxu0 0.0
        %418 = vmatprep.mubr.f32.mxu0 0.0
        %419 = vmatmul.mubr.f32.gmra.mrb[0].mxu0 %v348
        %v420 = vpop.f32.mrb[0].mxu0
        %v421 = vadd.f32 0.0, %v420
        %v422 = vpop.f32.mrb[0].mxu0
        %423 = vdwg.mxu0
        %v424 = vmul.f32 %v342, %v421
        %v425 = vld [vmem:[#allocation5] sm:$0xff]
        %v426 = vld [vmem:[#allocation5 + $0x8] sm:$0xff]
        %v427 = vld [vmem:[#allocation5 + $0x10] sm:$0xff]
        %v428 = vld [vmem:[#allocation5 + $0x18] sm:$0xff]
        %vm429 = vcmask 261120
        %v431 = vsel %vm429, %v424, 0
        %433 = vmatprep.subr.mxu0 0.0
        %434 = vmatpush1.msra.mxu0 %v425
        %435 = vmatprep.subr.mxu0 0.0
        %436 = vmatpush1.msra.mxu0 %v426
        %437 = vmatprep.subr.mxu0 0.0
        %438 = vmatpush1.msra.mxu0 %v427
        %439 = vmatprep.subr.mxu0 0.0
        %440 = vmatpush1.msra.mxu0 %v428
        %441 = vmatprep.subr.mxu0 0.0
        %442 = vmatpush1.msra.mxu0 0.0
        %443 = vmatprep.subr.mxu0 0.0
        %444 = vmatpush1.msra.mxu0 0.0
        %445 = vmatprep.subr.mxu0 0.0
        %446 = vmatpush1.msra.mxu0 0.0
        %447 = vmatprep.subr.mxu0 0.0
        %448 = vmatpush1.msra.mxu0 0.0
        %449 = vmatprep.subr.mxu0 0.0
        %450 = vmatpush1.msra.mxu0 0.0
        %451 = vmatprep.subr.mxu0 0.0
        %452 = vmatpush1.msra.mxu0 0.0
        %453 = vmatprep.subr.mxu0 0.0
        %454 = vmatpush1.msra.mxu0 0.0
        %455 = vmatprep.subr.mxu0 0.0
        %456 = vmatpush1.msra.mxu0 0.0
        %457 = vmatprep.subr.mxu0 0.0
        %458 = vmatpush1.msra.mxu0 0.0
        %459 = vmatprep.subr.mxu0 0.0
        %460 = vmatpush1.msra.mxu0 0.0
        %461 = vmatprep.subr.mxu0 0.0
        %462 = vmatpush1.msra.mxu0 0.0
        %463 = vmatprep.subr.mxu0 0.0
        %464 = vmatpush1.msra.mxu0 0.0
        %465 = vmatprep.subr.mxu0 0.0
        %466 = vmatpush1.msra.mxu0 0.0
        %467 = vmatprep.subr.mxu0 0.0
        %468 = vmatpush1.msra.mxu0 0.0
        %469 = vmatprep.subr.mxu0 0.0
        %470 = vmatpush1.msra.mxu0 0.0
        %471 = vmatprep.subr.mxu0 0.0
        %472 = vmatpush1.msra.mxu0 0.0
        %473 = vmatprep.subr.mxu0 0.0
        %474 = vmatpush1.msra.mxu0 0.0
        %475 = vmatprep.subr.mxu0 0.0
        %476 = vmatpush1.msra.mxu0 0.0
        %477 = vmatprep.subr.mxu0 0.0
        %478 = vmatpush1.msra.mxu0 0.0
        %479 = vmatprep.subr.mxu0 0.0
        %480 = vmatpush1.msra.mxu0 0.0
        %481 = vmatprep.subr.mxu0 0.0
        %482 = vmatpush1.msra.mxu0 0.0
        %483 = vmatprep.subr.mxu0 0.0
        %484 = vmatpush1.msra.mxu0 0.0
        %485 = vmatprep.subr.mxu0 0.0
        %486 = vmatpush1.msra.mxu0 0.0
        %487 = vmatprep.subr.mxu0 0.0
        %488 = vmatpush1.msra.mxu0 0.0
        %489 = vmatprep.subr.mxu0 0.0
        %490 = vmatpush1.msra.mxu0 0.0
        %491 = vmatprep.subr.mxu0 0.0
        %492 = vmatpush1.msra.mxu0 0.0
        %493 = vmatprep.subr.mxu0 0.0
        %494 = vmatpush1.msra.mxu0 0.0
        %495 = vmatprep.subr.mxu0 0.0
        %496 = vmatpush1.msra.mxu0 0.0
        %497 = vmatprep.mubr.f32.mxu0 0.0
        %498 = vmatmul.mubr.f32.gmra.mrb[0].mxu0 %v431
        %v499 = vpop.f32.mrb[0].mxu0
        %v500 = vadd.f32 0.0, %v499
        %v501 = vpop.f32.mrb[0].mxu0
        %502 = vdwg.mxu0
        %503 = vst [vmem:[%s258] sm:$0xff] %v500
        %s504 = scalar_lea.vmem [#allocation2], 16
        %v505 = vld [vmem:[%s504] sm:$0xff]
        %v506 = vld [vmem:[%s504 + $0x8] sm:$0xff]
        %507 = vmatprep.subr.mxu0 0.0
        %508 = vmatpush1.msra.mxu0 %v505
        %509 = vmatprep.subr.mxu0 0.0
        %510 = vmatpush1.msra.mxu0 %v506
        %511 = vmatprep.subr.mxu0 0.0
        %512 = vmatpush1.msra.mxu0 0.0
        %513 = vmatprep.subr.mxu0 0.0
        %514 = vmatpush1.msra.mxu0 0.0
        %515 = vmatprep.subr.mxu0 0.0
        %516 = vmatpush1.msra.mxu0 0.0
        %517 = vmatprep.subr.mxu0 0.0
        %518 = vmatpush1.msra.mxu0 0.0
        %519 = vmatprep.subr.mxu0 0.0
        %520 = vmatpush1.msra.mxu0 0.0
        %521 = vmatprep.subr.mxu0 0.0
        %522 = vmatpush1.msra.mxu0 0.0
        %523 = vmatprep.subr.mxu0 0.0
        %524 = vmatpush1.msra.mxu0 0.0
        %525 = vmatprep.subr.mxu0 0.0
        %526 = vmatpush1.msra.mxu0 0.0
        %527 = vmatprep.subr.mxu0 0.0
        %528 = vmatpush1.msra.mxu0 0.0
        %529 = vmatprep.subr.mxu0 0.0
        %530 = vmatpush1.msra.mxu0 0.0
        %531 = vmatprep.subr.mxu0 0.0
        %532 = vmatpush1.msra.mxu0 0.0
        %533 = vmatprep.subr.mxu0 0.0
        %534 = vmatpush1.msra.mxu0 0.0
        %535 = vmatprep.subr.mxu0 0.0
        %536 = vmatpush1.msra.mxu0 0.0
        %537 = vmatprep.subr.mxu0 0.0
        %538 = vmatpush1.msra.mxu0 0.0
        %539 = vmatprep.subr.mxu0 0.0
        %540 = vmatpush1.msra.mxu0 0.0
        %541 = vmatprep.subr.mxu0 0.0
        %542 = vmatpush1.msra.mxu0 0.0
        %543 = vmatprep.subr.mxu0 0.0
        %544 = vmatpush1.msra.mxu0 0.0
        %545 = vmatprep.subr.mxu0 0.0
        %546 = vmatpush1.msra.mxu0 0.0
        %547 = vmatprep.subr.mxu0 0.0
        %548 = vmatpush1.msra.mxu0 0.0
        %549 = vmatprep.subr.mxu0 0.0
        %550 = vmatpush1.msra.mxu0 0.0
        %551 = vmatprep.subr.mxu0 0.0
        %552 = vmatpush1.msra.mxu0 0.0
        %553 = vmatprep.subr.mxu0 0.0
        %554 = vmatpush1.msra.mxu0 0.0
        %555 = vmatprep.subr.mxu0 0.0
        %556 = vmatpush1.msra.mxu0 0.0
        %557 = vmatprep.subr.mxu0 0.0
        %558 = vmatpush1.msra.mxu0 0.0
        %559 = vmatprep.subr.mxu0 0.0
        %560 = vmatpush1.msra.mxu0 0.0
        %561 = vmatprep.subr.mxu0 0.0
        %562 = vmatpush1.msra.mxu0 0.0
        %563 = vmatprep.subr.mxu0 0.0
        %564 = vmatpush1.msra.mxu0 0.0
        %565 = vmatprep.subr.mxu0 0.0
        %566 = vmatpush1.msra.mxu0 0.0
        %567 = vmatprep.subr.mxu0 0.0
        %568 = vmatpush1.msra.mxu0 0.0
        %569 = vmatprep.subr.mxu0 0.0
        %570 = vmatpush1.msra.mxu0 0.0
        %571 = vmatprep.mubr.f32.mxu0 0.0
        %572 = vmatmul.mubr.f32.gmra.mrb[0].mxu0 %v273
        %v573 = vpop.f32.mrb[0].mxu0
        %v574 = vadd.f32 0.0, %v573
        %v575 = vpop.f32.mrb[0].mxu0
        %576 = vdwg.mxu0
        %s577 = scalar_lea.vmem %s3, 4
        %v578 = vld [vmem:[%s577] sm:$0xf]
        %v580 = vsel %vm350, %v578, 0
        %582 = vmatprep.subr.mxu0 0.0
        %583 = vmatpush1.msra.mxu0 %v580
        %584 = vmatprep.subr.mxu0 0.0
        %585 = vmatpush1.msra.mxu0 0.0
        %586 = vmatprep.subr.mxu0 0.0
        %587 = vmatpush1.msra.mxu0 0.0
        %588 = vmatprep.subr.mxu0 0.0
        %589 = vmatpush1.msra.mxu0 0.0
        %590 = vmatprep.subr.mxu0 0.0
        %591 = vmatpush1.msra.mxu0 0.0
        %592 = vmatprep.subr.mxu0 0.0
        %593 = vmatpush1.msra.mxu0 0.0
        %594 = vmatprep.subr.mxu0 0.0
        %595 = vmatpush1.msra.mxu0 0.0
        %596 = vmatprep.subr.mxu0 0.0
        %597 = vmatpush1.msra.mxu0 0.0
        %598 = vmatprep.subr.mxu0 0.0
        %599 = vmatpush1.msra.mxu0 0.0
        %600 = vmatprep.subr.mxu0 0.0
        %601 = vmatpush1.msra.mxu0 0.0
        %602 = vmatprep.subr.mxu0 0.0
        %603 = vmatpush1.msra.mxu0 0.0
        %604 = vmatprep.subr.mxu0 0.0
        %605 = vmatpush1.msra.mxu0 0.0
        %606 = vmatprep.subr.mxu0 0.0
        %607 = vmatpush1.msra.mxu0 0.0
        %608 = vmatprep.subr.mxu0 0.0
        %609 = vmatpush1.msra.mxu0 0.0
        %610 = vmatprep.subr.mxu0 0.0
        %611 = vmatpush1.msra.mxu0 0.0
        %612 = vmatprep.subr.mxu0 0.0
        %613 = vmatpush1.msra.mxu0 0.0
        %614 = vmatprep.subr.mxu0 0.0
        %615 = vmatpush1.msra.mxu0 0.0
        %616 = vmatprep.subr.mxu0 0.0
        %617 = vmatpush1.msra.mxu0 0.0
        %618 = vmatprep.subr.mxu0 0.0
        %619 = vmatpush1.msra.mxu0 0.0
        %620 = vmatprep.subr.mxu0 0.0
        %621 = vmatpush1.msra.mxu0 0.0
        %622 = vmatprep.subr.mxu0 0.0
        %623 = vmatpush1.msra.mxu0 0.0
        %624 = vmatprep.subr.mxu0 0.0
        %625 = vmatpush1.msra.mxu0 0.0
        %626 = vmatprep.subr.mxu0 0.0
        %627 = vmatpush1.msra.mxu0 0.0
        %628 = vmatprep.subr.mxu0 0.0
        %629 = vmatpush1.msra.mxu0 0.0
        %630 = vmatprep.subr.mxu0 0.0
        %631 = vmatpush1.msra.mxu0 0.0
        %632 = vmatprep.subr.mxu0 0.0
        %633 = vmatpush1.msra.mxu0 0.0
        %634 = vmatprep.subr.mxu0 0.0
        %635 = vmatpush1.msra.mxu0 0.0
        %636 = vmatprep.subr.mxu0 0.0
        %637 = vmatpush1.msra.mxu0 0.0
        %638 = vmatprep.subr.mxu0 0.0
        %639 = vmatpush1.msra.mxu0 0.0
        %640 = vmatprep.subr.mxu0 0.0
        %641 = vmatpush1.msra.mxu0 0.0
        %642 = vmatprep.subr.mxu0 0.0
        %643 = vmatpush1.msra.mxu0 0.0
        %644 = vmatprep.subr.mxu0 0.0
        %645 = vmatpush1.msra.mxu0 0.0
        %646 = vmatprep.mubr.f32.mxu0 0.0
        %647 = vmatmul.mubr.f32.gmra.mrb[0].mxu0 %v348
        %v648 = vpop.f32.mrb[0].mxu0
        %v649 = vadd.f32 0.0, %v648
        %v650 = vpop.f32.mrb[0].mxu0
        %651 = vdwg.mxu0
        %v652 = vmul.f32 %v574, %v649
        %s653 = scalar_lea.vmem [#allocation5], 32
        %v654 = vld [vmem:[%s653] sm:$0xff]
        %v655 = vld [vmem:[%s653 + $0x8] sm:$0xff]
        %v656 = vld [vmem:[%s653 + $0x10] sm:$0xff]
        %v657 = vld [vmem:[%s653 + $0x18] sm:$0xff]
        %v659 = vsel %vm429, %v652, 0
        %661 = vmatprep.subr.mxu0 0.0
        %662 = vmatpush1.msra.mxu0 %v654
        %663 = vmatprep.subr.mxu0 0.0
        %664 = vmatpush1.msra.mxu0 %v655
        %665 = vmatprep.subr.mxu0 0.0
        %666 = vmatpush1.msra.mxu0 %v656
        %667 = vmatprep.subr.mxu0 0.0
        %668 = vmatpush1.msra.mxu0 %v657
        %669 = vmatprep.subr.mxu0 0.0
        %670 = vmatpush1.msra.mxu0 0.0
        %671 = vmatprep.subr.mxu0 0.0
        %672 = vmatpush1.msra.mxu0 0.0
        %673 = vmatprep.subr.mxu0 0.0
        %674 = vmatpush1.msra.mxu0 0.0
        %675 = vmatprep.subr.mxu0 0.0
        %676 = vmatpush1.msra.mxu0 0.0
        %677 = vmatprep.subr.mxu0 0.0
        %678 = vmatpush1.msra.mxu0 0.0
        %679 = vmatprep.subr.mxu0 0.0
        %680 = vmatpush1.msra.mxu0 0.0
        %681 = vmatprep.subr.mxu0 0.0
        %682 = vmatpush1.msra.mxu0 0.0
        %683 = vmatprep.subr.mxu0 0.0
        %684 = vmatpush1.msra.mxu0 0.0
        %685 = vmatprep.subr.mxu0 0.0
        %686 = vmatpush1.msra.mxu0 0.0
        %687 = vmatprep.subr.mxu0 0.0
        %688 = vmatpush1.msra.mxu0 0.0
        %689 = vmatprep.subr.mxu0 0.0
        %690 = vmatpush1.msra.mxu0 0.0
        %691 = vmatprep.subr.mxu0 0.0
        %692 = vmatpush1.msra.mxu0 0.0
        %693 = vmatprep.subr.mxu0 0.0
        %694 = vmatpush1.msra.mxu0 0.0
        %695 = vmatprep.subr.mxu0 0.0
        %696 = vmatpush1.msra.mxu0 0.0
        %697 = vmatprep.subr.mxu0 0.0
        %698 = vmatpush1.msra.mxu0 0.0
        %699 = vmatprep.subr.mxu0 0.0
        %700 = vmatpush1.msra.mxu0 0.0
        %701 = vmatprep.subr.mxu0 0.0
        %702 = vmatpush1.msra.mxu0 0.0
        %703 = vmatprep.subr.mxu0 0.0
        %704 = vmatpush1.msra.mxu0 0.0
        %705 = vmatprep.subr.mxu0 0.0
        %706 = vmatpush1.msra.mxu0 0.0
        %707 = vmatprep.subr.mxu0 0.0
        %708 = vmatpush1.msra.mxu0 0.0
        %709 = vmatprep.subr.mxu0 0.0
        %710 = vmatpush1.msra.mxu0 0.0
        %711 = vmatprep.subr.mxu0 0.0
        %712 = vmatpush1.msra.mxu0 0.0
        %713 = vmatprep.subr.mxu0 0.0
        %714 = vmatpush1.msra.mxu0 0.0
        %715 = vmatprep.subr.mxu0 0.0
        %716 = vmatpush1.msra.mxu0 0.0
        %717 = vmatprep.subr.mxu0 0.0
        %718 = vmatpush1.msra.mxu0 0.0
        %719 = vmatprep.subr.mxu0 0.0
        %720 = vmatpush1.msra.mxu0 0.0
        %721 = vmatprep.subr.mxu0 0.0
        %722 = vmatpush1.msra.mxu0 0.0
        %723 = vmatprep.subr.mxu0 0.0
        %724 = vmatpush1.msra.mxu0 0.0
        %725 = vmatprep.mubr.f32.mxu0 0.0
        %726 = vmatmul.mubr.f32.gmra.mrb[0].mxu0 %v659
        %v727 = vpop.f32.mrb[0].mxu0
        %v728 = vadd.f32 0.0, %v727
        %v729 = vpop.f32.mrb[0].mxu0
        %730 = vdwg.mxu0
        %731 = vst [vmem:[%s258 + $0x8] sm:$0xff] %v728
        %s732 = sand.u32 %s144, 1
        %s733 = scalar_lea.sflag [#allocation4], %s732
        %s734 = sand.u32 %s144, 1
        %s735 = smul.addr %s734, 16
        %s736 = scalar_lea.vmem [#allocation7], %s735
        // Predicated region
        $region49: #{tpu_custom_call.1} parent=39 // pred_check
          %p737 = pneg %p154
        $region50: #{tpu_custom_call.1} parent=39 // pred_check_branch
          %739 = sbr.rel (%p737) target = $region52
        $region51: #{tpu_custom_call.1} parent=39 // pred_region
          %s741 = ssub.s32 256, 256
          %742 = vsyncadd %s733, %s741
          %s743 = smul.addr %s21, 2
          %s744 = smul.addr %s743, 128
          %s745 = scalar_lea.hbm %s5, %s744
          %s747 = sshll.u32 %s736, 4
          %s748 = int_to_ptr.vmem [resolvable:$true] %s747
          %750 = dma.vmem_to_hbm [thread:$0]  %s748, 256, %s745, %s733
        $region52: #{tpu_custom_call.1} parent=39 // pred_fallthru
          _
      $region40: #{tpu_custom_call.1} parent=5 // pred_fallthru
        _
      %p751 = scmp.le.s32.totalorder 2, %s16
      // Predicated region
      $region53: #{tpu_custom_call.1} parent=5 // pred_check
        %p752 = pneg %p751
      $region54: #{tpu_custom_call.1} parent=5 // pred_check_branch
        %754 = sbr.rel (%p752) target = $region56
      $region55: #{tpu_custom_call.1} parent=5 // pred_region
        %s755 = ssub.s32 %s16, 2
        // Predicated region
        $region57: #{tpu_custom_call.1} parent=55 // pred_check
          %p756 = pneg %p160
        $region58: #{tpu_custom_call.1} parent=55 // pred_check_branch
          %758 = sbr.rel (%p756) target = $region60
        $region59: #{tpu_custom_call.1} parent=55 // pred_region
          %s759 = sand.u32 %s145, 1
          %s760 = scalar_lea.sflag [#allocation4], %s759
          %s761 = sand.u32 %s145, 1
          %s762 = smul.addr %s761, 16
          %s763 = scalar_lea.vmem [#allocation7], %s762
          %764 = dma.done %s760, 256
        $region60: #{tpu_custom_call.1} parent=55 // pred_fallthru
          _
      $region56: #{tpu_custom_call.1} parent=5 // pred_fallthru
        _
    $region6: #{tpu_custom_call.1} parent=1 // loop_footer
      %s20 = sadd.s32 1, %s16
    $region7: #{tpu_custom_call.1} parent=1 // loop_footer_branch
      %15 = sbr.rel target = $region3
    $region8: #{tpu_custom_call.1} parent=1 // loop_exit
      _
    %765 = vsyncpa [#allocation3], 1
    %s766 = scalar_lea.sflag [#allocation3], 1
    %767 = vsyncpa %s766, 1
    %768 = vsyncpa [#allocation6], 1
    %769 = vsyncpa [#allocation4], 1
    %s770 = scalar_lea.sflag [#allocation4], 1
    %771 = vsyncpa %s770, 1

</llo_original>
